<compile_context>
chip_gen: v5e
topology: v5e:2x2
jax: 0.10.0
libtpu: 0.0.40
codegen_flags: <defaults>
</compile_context>

<pallas_src>
import functools

import jax
import jax.numpy as jnp
from jax import lax
from jax.experimental import pallas as pl
from jax.experimental.pallas import tpu as pltpu


def _round_up(n, m):
    return ((n + m - 1) // m) * m


def disc_kernel(x_ref, w1_ref, b1_ref, w2_ref, b2_ref, w3_ref, b3_ref, o_ref,
                *, operand_dtype):
    """One batch tile of the discriminator.

    x_ref : (TB, input_size)       natural row-major batch tile (contiguous HBM read)
    w1_ref: (hidden, input_size)   b1_ref: (hidden, 1)
    w2_ref: (hidden//2, hidden)    b2_ref: (hidden//2, 1)
    w3_ref: (hidden//2, 1)         b3_ref: (1, 1) in SMEM
    o_ref : (1, TB)                lane-dense sigmoid output
    """
    x = x_ref[...].astype(operand_dtype)          # MXU operand dtype (f32 or bf16)
    w1 = w1_ref[...].astype(operand_dtype)

    # Layer 1: trans-B MXU matmul (contract last dims of both operands) -> (hidden, TB),
    # batch on lanes; no host- or kernel-side transpose of x needed.  f32 accumulate.
    h1 = lax.dot_general(w1, x, (((1,), (1,)), ((), ())),
                         preferred_element_type=jnp.float32) + b1_ref[...]
    h1 = jnp.maximum(h1, 0.2 * h1)                # LeakyReLU(0.2), f32 VPU math

    # Layer 2: (half, hidden) @ (hidden, TB) -> (half, TB).
    w2 = w2_ref[...].astype(operand_dtype)
    h2 = jnp.dot(w2, h1.astype(operand_dtype),
                 preferred_element_type=jnp.float32) + b2_ref[...]
    h2 = jnp.maximum(h2, 0.2 * h2)

    # Layer 3 (out_features == 1): VPU multiply + sublane (XLU) reduce, SMEM scalar bias.
    z = jnp.sum(h2 * w3_ref[...], axis=0, keepdims=True) + b3_ref[0, 0]
    o_ref[...] = jax.nn.sigmoid(z)                # (1, TB) lane-dense store


def _pick_batch_tile(B, input_size, hidden, half, x_bytes, tb_max):
    """Batch tile (multiple of 128) from a VMEM budget, targeting 8K-32K lanes."""
    tb_max = max(128, (tb_max // 128) * 128)      # defensive: keep tb a multiple of 128
    # VMEM bytes per batch lane: double-buffered x tile + double-buffered out tile
    # + f32 h1/h2 intermediates.
    per_lane = 2 * input_size * x_bytes + 2 * 4 + 4 * (hidden + half)
    act_budget = 24 << 20                         # conservative vs v7x's 64 MiB physical
    tb = (act_budget // per_lane) // 128 * 128
    tb = max(128, min(tb, tb_max))
    cap = _round_up(B, 128)
    if B >= 256:                                  # keep >=2 grid steps for v7x megacore
        cap = max(128, min(cap, _round_up(-(-B // 2), 128)))
    return min(tb, cap)


def disc_forward(x, params, *, operand_dtype=jnp.float32, tb_max=32 * 1024):
    """Discriminator forward: x (B, input_size) -> (B, 1) f32.

    operand_dtype=jnp.bfloat16 uses bf16 MXU operands with f32 accumulation (v6e/v7x);
    passing x already in bf16 additionally halves the dominant HBM stream.
    """
    w1, b1, w2, b2, w3, b3 = params
    B, input_size = x.shape
    hidden = w1.shape[0]
    half = w2.shape[0]
    x_bytes = jnp.dtype(x.dtype).itemsize

    tb = _pick_batch_tile(B, input_size, hidden, half, x_bytes, tb_max)
    b_pad = _round_up(B, tb)
    grid = (b_pad // tb,)

    # x stays in its natural row-major layout; rows are padded only when B isn't already
    # tile-aligned (no-op passthrough in the aligned case, no transpose ever).  Padded
    # rows produce sigmoid(bias) values that are sliced away below.
    x_in = x if b_pad == B else jnp.pad(x, ((0, b_pad - B), (0, 0)))

    weight_bytes = 4 * (hidden * input_size + hidden + half * hidden + 2 * half)
    per_lane = 2 * input_size * x_bytes + 2 * 4 + 4 * (hidden + half)
    need = tb * per_lane + 2 * weight_bytes
    # Raise scoped VMEM explicitly (v5e default is 16 MiB); cap with headroom for v7x.
    vmem_limit = int(min(48 << 20, max(32 << 20, 2 * need)))

    flops = 2 * b_pad * (input_size * hidden + hidden * half + half)
    bytes_accessed = (x_in.size * x_bytes + b_pad * 4
                      + 4 * (w1.size + b1.size + w2.size + b2.size + w3.size + b3.size))

    kernel = functools.partial(disc_kernel, operand_dtype=operand_dtype)

    out_pad = pl.pallas_call(
        kernel,
        out_shape=jax.ShapeDtypeStruct((1, b_pad), jnp.float32),
        grid=grid,
        in_specs=[
            pl.BlockSpec((tb, input_size), lambda i: (i, 0)),      # x: natural layout, tiled
            pl.BlockSpec((hidden, input_size), lambda i: (0, 0)),  # w1: VMEM-resident
            pl.BlockSpec((hidden, 1), lambda i: (0, 0)),           # b1: resident
            pl.BlockSpec((half, hidden), lambda i: (0, 0)),        # w2: resident
            pl.BlockSpec((half, 1), lambda i: (0, 0)),             # b2: resident
            pl.BlockSpec((half, 1), lambda i: (0, 0)),             # w3 column: resident
            pl.BlockSpec(memory_space=pltpu.MemorySpace.SMEM),     # b3: SMEM scalar
        ],
        out_specs=pl.BlockSpec((1, tb), lambda i: (0, i)),
        compiler_params=pltpu.CompilerParams(
            dimension_semantics=("parallel",),                     # megacore sharding on v7x
            vmem_limit_bytes=vmem_limit),
        cost_estimate=pl.CostEstimate(
            flops=flops, transcendentals=b_pad, bytes_accessed=bytes_accessed),
    )(x_in, w1, b1, w2, b2, w3, b3)

    return out_pad[:, :B].T  # (B, 1)


def init_disc_params(key, input_size, hidden_size):
    """torch.nn.Linear default init (U(-1/sqrt(fan_in), 1/sqrt(fan_in))) in kernel layout:
    W as (out_features, in_features), b as (out_features, 1); final layer weight stored
    as a (hidden//2, 1) column and final bias as a (1, 1) scalar."""
    half = hidden_size // 2
    dims = [(input_size, hidden_size), (hidden_size, half), (half, 1)]
    raw = []
    for fan_in, fan_out in dims:
        key, kw, kb = jax.random.split(key, 3)
        bound = 1.0 / jnp.sqrt(jnp.float32(fan_in))
        w = jax.random.uniform(kw, (fan_out, fan_in), jnp.float32, -bound, bound)
        b = jax.random.uniform(kb, (fan_out, 1), jnp.float32, -bound, bound)
        raw += [w, b]
    w1, b1, w2, b2, w3, b3 = raw
    return (w1, b1, w2, b2, w3.T, b3)  # w3.T: (half, 1); b3: (1, 1)


def disc_reference(x, params):
    """Pure-JAX reference of the same forward pass (for correctness check)."""
    w1, b1, w2, b2, w3, b3 = params
    h1 = x @ w1.T + b1.T
    h1 = jnp.where(h1 >= 0, h1, 0.2 * h1)
    h2 = h1 @ w2.T + b2.T
    h2 = jnp.where(h2 >= 0, h2, 0.2 * h2)
    return jax.nn.sigmoid(h2 @ w3 + b3)


if __name__ == "__main__":
    key = jax.random.PRNGKey(0)
    batch, input_size, hidden_size = 8, 16, 32

    key, kx = jax.random.split(key)
    x = jax.random.normal(kx, (batch, input_size), jnp.float32)
    params = init_disc_params(key, input_size, hidden_size)

    ref = disc_reference(x, params)

    # f32 path: bit-for-bit-ish match against the PyTorch-equivalent reference.
    out = jax.block_until_ready(disc_forward(x, params))
    assert out.shape == (batch, 1)
    assert jnp.allclose(out, ref, atol=1e-5, rtol=1e-5)

    # bf16 MXU-operand path (f32 accumulation): looser tolerance vs the f32 reference.
    out_bf16 = jax.block_until_ready(disc_forward(x, params, operand_dtype=jnp.bfloat16))
    assert out_bf16.shape == (batch, 1)
    assert jnp.allclose(out_bf16, ref, atol=2e-2, rtol=2e-2)

    print("KERNEL_OK")
</pallas_src>

<mosaic_0001>
module attributes {stable_mosaic.version = 11 : i64} {
  func.func @disc_kernel(%arg0: i32, %arg1: memref<128x16xf32, #tpu.memory_space<vmem>>, %arg2: memref<32x16xf32, #tpu.memory_space<vmem>>, %arg3: memref<32x1xf32, #tpu.memory_space<vmem>>, %arg4: memref<16x32xf32, #tpu.memory_space<vmem>>, %arg5: memref<16x1xf32, #tpu.memory_space<vmem>>, %arg6: memref<16x1xf32, #tpu.memory_space<vmem>>, %arg7: memref<1x1xf32, #tpu.memory_space<smem>>, %arg8: memref<1x128xf32, #tpu.memory_space<vmem>>) attributes {dimension_semantics = [#tpu.dimension_semantics<parallel>], iteration_bounds = array<i64: 1>, scalar_prefetch = 0 : i64, scratch_operands = 0 : i64, tpu.core_type = #tpu.core_type<tc>, window_params = [{transform_indices = @transform_0, window_bounds = array<i64: 128, 16>}, {pipeline_mode = #tpu.pipeline_mode<synchronous>, transform_indices = @transform_1, window_bounds = array<i64: 32, 16>}, {pipeline_mode = #tpu.pipeline_mode<synchronous>, transform_indices = @transform_2, window_bounds = array<i64: 32, 1>}, {pipeline_mode = #tpu.pipeline_mode<synchronous>, transform_indices = @transform_3, window_bounds = array<i64: 16, 32>}, {pipeline_mode = #tpu.pipeline_mode<synchronous>, transform_indices = @transform_4, window_bounds = array<i64: 16, 1>}, {pipeline_mode = #tpu.pipeline_mode<synchronous>, transform_indices = @transform_5, window_bounds = array<i64: 16, 1>}, {transform_indices = @transform_6, window_bounds = array<i64: 1, 1>}, {transform_indices = @transform_7, window_bounds = array<i64: 1, 128>}]} {
    %c0 = arith.constant 0 : index
    %c0_0 = arith.constant 0 : index
    %0 = vector.load %arg1[%c0, %c0_0] : memref<128x16xf32, #tpu.memory_space<vmem>>, vector<128x16xf32>
    %c0_1 = arith.constant 0 : index
    %c0_2 = arith.constant 0 : index
    %1 = vector.load %arg2[%c0_1, %c0_2] : memref<32x16xf32, #tpu.memory_space<vmem>>, vector<32x16xf32>
    %cst = arith.constant dense<0.000000e+00> : vector<32x128xf32>
    %2 = tpu.matmul %1, %0, %cst {dimension_numbers = #tpu.dot_dimension_numbers<[1], [1], [0], [0], [0, 0, 1, 0], [], []>} : vector<32x16xf32>, vector<128x16xf32>, vector<32x128xf32> -> vector<32x128xf32>
    %c0_3 = arith.constant 0 : index
    %c0_4 = arith.constant 0 : index
    %3 = vector.load %arg3[%c0_3, %c0_4] : memref<32x1xf32, #tpu.memory_space<vmem>>, vector<32x1xf32>
    %4 = vector.broadcast %3 : vector<32x1xf32> to vector<32x128xf32>
    %5 = arith.addf %2, %4 : vector<32x128xf32>
    %cst_5 = arith.constant 2.000000e-01 : f32
    %6 = vector.broadcast %cst_5 : f32 to vector<32x128xf32>
    %7 = arith.mulf %6, %5 : vector<32x128xf32>
    %8 = arith.maximumf %5, %7 : vector<32x128xf32>
    %c0_6 = arith.constant 0 : index
    %c0_7 = arith.constant 0 : index
    %9 = vector.load %arg4[%c0_6, %c0_7] : memref<16x32xf32, #tpu.memory_space<vmem>>, vector<16x32xf32>
    %cst_8 = arith.constant dense<0.000000e+00> : vector<16x128xf32>
    %10 = tpu.matmul %9, %8, %cst_8 {dimension_numbers = #tpu.dot_dimension_numbers<[1], [0], [0], [1], [0, 0, 1, 1], [], []>} : vector<16x32xf32>, vector<32x128xf32>, vector<16x128xf32> -> vector<16x128xf32>
    %c0_9 = arith.constant 0 : index
    %c0_10 = arith.constant 0 : index
    %11 = vector.load %arg5[%c0_9, %c0_10] : memref<16x1xf32, #tpu.memory_space<vmem>>, vector<16x1xf32>
    %12 = vector.broadcast %11 : vector<16x1xf32> to vector<16x128xf32>
    %13 = arith.addf %10, %12 : vector<16x128xf32>
    %cst_11 = arith.constant 2.000000e-01 : f32
    %14 = vector.broadcast %cst_11 : f32 to vector<16x128xf32>
    %15 = arith.mulf %14, %13 : vector<16x128xf32>
    %16 = arith.maximumf %13, %15 : vector<16x128xf32>
    %c0_12 = arith.constant 0 : index
    %c0_13 = arith.constant 0 : index
    %17 = vector.load %arg6[%c0_12, %c0_13] : memref<16x1xf32, #tpu.memory_space<vmem>>, vector<16x1xf32>
    %18 = vector.broadcast %17 : vector<16x1xf32> to vector<16x128xf32>
    %19 = arith.mulf %16, %18 : vector<16x128xf32>
    %cst_14 = arith.constant dense<0.000000e+00> : vector<128xf32>
    %20 = vector.multi_reduction <add>, %19, %cst_14 [0] : vector<16x128xf32> to vector<128xf32>
    %21 = vector.shape_cast %20 : vector<128xf32> to vector<1x128xf32>
    %c0_15 = arith.constant 0 : index
    %c0_16 = arith.constant 0 : index
    %22 = memref.load %arg7[%c0_15, %c0_16] : memref<1x1xf32, #tpu.memory_space<smem>>
    %23 = vector.broadcast %22 : f32 to vector<1x128xf32>
    %24 = arith.addf %21, %23 : vector<1x128xf32>
    %25 = arith.negf %24 : vector<1x128xf32>
    %26 = math.exp %25 : vector<1x128xf32>
    %cst_17 = arith.constant 1.000000e+00 : f32
    %27 = vector.broadcast %cst_17 : f32 to vector<1x128xf32>
    %28 = arith.addf %27, %26 : vector<1x128xf32>
    %29 = arith.divf %27, %28 : vector<1x128xf32>
    %c0_18 = arith.constant 0 : index
    %c0_19 = arith.constant 0 : index
    %30 = vector.load %arg8[%c0_18, %c0_19] : memref<1x128xf32, #tpu.memory_space<vmem>>, vector<1x128xf32>
    tpu.vector_store %arg8[%c0_18, %c0_19], %29 {strides = array<i32>} : memref<1x128xf32, #tpu.memory_space<vmem>>, vector<1x128xf32>,
    return
  }
  func.func @transform_0(%arg0: i32) -> (i32, i32) {
    %c0_i32 = arith.constant 0 : i32
    %c0_i32_0 = arith.constant 0 : i32
    return %arg0, %c0_i32 : i32, i32
  }
  func.func @transform_1(%arg0: i32) -> (i32, i32) {
    %c0_i32 = arith.constant 0 : i32
    %c0_i32_0 = arith.constant 0 : i32
    %c0_i32_1 = arith.constant 0 : i32
    return %c0_i32, %c0_i32_0 : i32, i32
  }
  func.func @transform_2(%arg0: i32) -> (i32, i32) {
    %c0_i32 = arith.constant 0 : i32
    %c0_i32_0 = arith.constant 0 : i32
    %c0_i32_1 = arith.constant 0 : i32
    return %c0_i32, %c0_i32_0 : i32, i32
  }
  func.func @transform_3(%arg0: i32) -> (i32, i32) {
    %c0_i32 = arith.constant 0 : i32
    %c0_i32_0 = arith.constant 0 : i32
    %c0_i32_1 = arith.constant 0 : i32
    return %c0_i32, %c0_i32_0 : i32, i32
  }
  func.func @transform_4(%arg0: i32) -> (i32, i32) {
    %c0_i32 = arith.constant 0 : i32
    %c0_i32_0 = arith.constant 0 : i32
    %c0_i32_1 = arith.constant 0 : i32
    return %c0_i32, %c0_i32_0 : i32, i32
  }
  func.func @transform_5(%arg0: i32) -> (i32, i32) {
    %c0_i32 = arith.constant 0 : i32
    %c0_i32_0 = arith.constant 0 : i32
    %c0_i32_1 = arith.constant 0 : i32
    return %c0_i32, %c0_i32_0 : i32, i32
  }
  func.func @transform_6(%arg0: i32) -> (i32, i32) {
    %c0_i32 = arith.constant 0 : i32
    %c0_i32_0 = arith.constant 0 : i32
    %c0_i32_1 = arith.constant 0 : i32
    return %c0_i32, %c0_i32_0 : i32, i32
  }
  func.func @transform_7(%arg0: i32) -> (i32, i32) {
    %c0_i32 = arith.constant 0 : i32
    %c0_i32_0 = arith.constant 0 : i32
    return %c0_i32, %arg0 : i32, i32
  }
}

</mosaic_0001>

<llo_original>
// kernel: tpu_custom_call.1
$region0: #{tpu_custom_call.1}
  #allocation0 [shape = 'u32[]', space=smem, size = 0x4, offset = 0x4, fixed_abs, tag = 'smem constant byte address 0x4 - core index']
  #allocation1 [shape = 'u32[72,128]{1,0:T(1,128)}', space=vmem, size = 0x9000, scoped, tag = 'internal scratch']
  #allocation2 [shape = 'f32[1,1]{1,0:T(1,128)S(6)}', space=smem, size = 0x200, scoped, tag = 'scoped memory for tpu_custom_call.1']
  %s0 = inlined_call_operand.vmem [shape: f32[128,16], index: 0, kind: input, shape index: {}]
  %s1 = inlined_call_operand.vmem [shape: f32[32,16], index: 1, kind: input, shape index: {}]
  %s2 = inlined_call_operand.vmem [shape: f32[32,1], index: 2, kind: input, shape index: {}]
  %s3 = inlined_call_operand.vmem [shape: f32[16,32], index: 3, kind: input, shape index: {}]
  %s4 = inlined_call_operand.vmem [shape: f32[16,1], index: 4, kind: input, shape index: {}]
  %s5 = inlined_call_operand.vmem [shape: f32[16,1], index: 5, kind: input, shape index: {}]
  %s6 = inlined_call_operand.<no memory space> [shape: f32[1,1], index: 6, kind: input, shape index: {}]
  %s7 = inlined_call_operand.hbm [shape: f32[1,128], index: 7, kind: output, shape index: {}]
  %s8 = sld [smem:[#allocation0]]
  $region38: #{tpu_custom_call.1} parent=0
    _
  %s10 = ssub.s32 1, %s8
  %s11 = scalar_select 0, %s10, %s8
  %12 = sst [smem:[#allocation2]] %s6
  $region1: #{tpu_custom_call.1} parent=0
    #allocation3 [shape = 'u8[512]{0}', space=vmem, size = 0x400, scoped, tag = 'output window, operand 0, single buffered']
    #allocation4 [shape = 's32[1]{0}', space=sflag, size = 0x4, scoped, tag = 'scoped memory for tpu_custom_call.1']
    %13 = vsyncpa [#allocation4], 0
    // Predicated region
    $region2: #{tpu_custom_call.1} parent=1 // pred_check
      _
    $region3: #{tpu_custom_call.1} parent=1 // pred_check_branch
      %15 = sbr.rel (0) target = $region5
    $region4: #{tpu_custom_call.1} parent=1 // pred_region
      _
    $region5: #{tpu_custom_call.1} parent=1 // pred_fallthru
      _
    // Predicated region
    $region6: #{tpu_custom_call.1} parent=1 // pred_check
      _
    $region7: #{tpu_custom_call.1} parent=1 // pred_check_branch
      %17 = sbr.rel (0) target = $region9
    $region8: #{tpu_custom_call.1} parent=1 // pred_region
      _
    $region9: #{tpu_custom_call.1} parent=1 // pred_fallthru
      _
    // Predicated region
    $region10: #{tpu_custom_call.1} parent=1 // pred_check
      _
    $region11: #{tpu_custom_call.1} parent=1 // pred_check_branch
      %19 = sbr.rel (0) target = $region13
    $region12: #{tpu_custom_call.1} parent=1 // pred_region
      _
    $region13: #{tpu_custom_call.1} parent=1 // pred_fallthru
      _
    // Predicated region
    $region14: #{tpu_custom_call.1} parent=1 // pred_check
      _
    $region15: #{tpu_custom_call.1} parent=1 // pred_check_branch
      %21 = sbr.rel (0) target = $region17
    $region16: #{tpu_custom_call.1} parent=1 // pred_region
      _
    $region17: #{tpu_custom_call.1} parent=1 // pred_fallthru
      _
    // Predicated region
    $region18: #{tpu_custom_call.1} parent=1 // pred_check
      _
    $region19: #{tpu_custom_call.1} parent=1 // pred_check_branch
      %23 = sbr.rel (0) target = $region21
    $region20: #{tpu_custom_call.1} parent=1 // pred_region
      _
    $region21: #{tpu_custom_call.1} parent=1 // pred_fallthru
      _
    // Predicated region
    $region22: #{tpu_custom_call.1} parent=1 // pred_check
      _
    $region23: #{tpu_custom_call.1} parent=1 // pred_check_branch
      %25 = sbr.rel (0) target = $region25
    $region24: #{tpu_custom_call.1} parent=1 // pred_region
      _
    $region25: #{tpu_custom_call.1} parent=1 // pred_fallthru
      _
    // Predicated region
    $region26: #{tpu_custom_call.1} parent=1 // pred_check
      _
    $region27: #{tpu_custom_call.1} parent=1 // pred_check_branch
      %27 = sbr.rel (0) target = $region29
    $region28: #{tpu_custom_call.1} parent=1 // pred_region
      _
    $region29: #{tpu_custom_call.1} parent=1 // pred_fallthru
      _
    %v28 = vld [vmem:[%s0] sm:$0xff]
    %v29 = vld [vmem:[%s0 + $0x8] sm:$0xff]
    %v30 = vld [vmem:[%s0 + $0x10] sm:$0xff]
    %v31 = vld [vmem:[%s0 + $0x18] sm:$0xff]
    %v32 = vld [vmem:[%s0 + $0x20] sm:$0xff]
    %v33 = vld [vmem:[%s0 + $0x28] sm:$0xff]
    %v34 = vld [vmem:[%s0 + $0x30] sm:$0xff]
    %v35 = vld [vmem:[%s0 + $0x38] sm:$0xff]
    %v36 = vld [vmem:[%s0 + $0x40] sm:$0xff]
    %v37 = vld [vmem:[%s0 + $0x48] sm:$0xff]
    %v38 = vld [vmem:[%s0 + $0x50] sm:$0xff]
    %v39 = vld [vmem:[%s0 + $0x58] sm:$0xff]
    %v40 = vld [vmem:[%s0 + $0x60] sm:$0xff]
    %v41 = vld [vmem:[%s0 + $0x68] sm:$0xff]
    %v42 = vld [vmem:[%s0 + $0x70] sm:$0xff]
    %v43 = vld [vmem:[%s0 + $0x78] sm:$0xff]
    %v44 = vld [vmem:[%s1] sm:$0xff]
    %v45 = vld [vmem:[%s1 + $0x8] sm:$0xff]
    %v46 = vld [vmem:[%s1 + $0x10] sm:$0xff]
    %v47 = vld [vmem:[%s1 + $0x18] sm:$0xff]
    %v48 = vld [vmem:[%s2] sm:$0xff]
    %v49 = vld [vmem:[%s2 + $0x8] sm:$0xff]
    %v50 = vld [vmem:[%s2 + $0x10] sm:$0xff]
    %v51 = vld [vmem:[%s2 + $0x18] sm:$0xff]
    %53 = vset.pattern.permute.xlu0 0
    %54 = vperm.xlu0 %53, %v48
    %v55 = vpop.permute.xlu0 %54
    %58 = vset.pattern.permute.xlu0 0
    %59 = vperm.xlu0 %58, %v49
    %v60 = vpop.permute.xlu0 %59
    %63 = vset.pattern.permute.xlu0 0
    %64 = vperm.xlu0 %63, %v50
    %v65 = vpop.permute.xlu0 %64
    %68 = vset.pattern.permute.xlu0 0
    %69 = vperm.xlu0 %68, %v51
    %v70 = vpop.permute.xlu0 %69
    %vm72 = vcmask 130048
    %v74 = vsel %vm72, %v44, 0
    %v77 = vsel %vm72, %v45, 0
    %v80 = vsel %vm72, %v46, 0
    %v83 = vsel %vm72, %v47, 0
    %v86 = vsel %vm72, %v28, 0
    %v89 = vsel %vm72, %v29, 0
    %v92 = vsel %vm72, %v30, 0
    %v95 = vsel %vm72, %v31, 0
    %v98 = vsel %vm72, %v32, 0
    %v101 = vsel %vm72, %v33, 0
    %v104 = vsel %vm72, %v34, 0
    %v107 = vsel %vm72, %v35, 0
    %v110 = vsel %vm72, %v36, 0
    %v113 = vsel %vm72, %v37, 0
    %v116 = vsel %vm72, %v38, 0
    %v119 = vsel %vm72, %v39, 0
    %v122 = vsel %vm72, %v40, 0
    %v125 = vsel %vm72, %v41, 0
    %v128 = vsel %vm72, %v42, 0
    %v131 = vsel %vm72, %v43, 0
    %133 = vmatpush.xpose.msra.mxu0 %v131
    %134 = vmatpush.xpose.msra.mxu0 %v128
    %135 = vmatpush.xpose.msra.mxu0 %v125
    %136 = vmatpush.xpose.msra.mxu0 %v122
    %137 = vmatpush.xpose.msra.mxu0 %v119
    %138 = vmatpush.xpose.msra.mxu0 %v116
    %139 = vmatpush.xpose.msra.mxu0 %v113
    %140 = vmatpush.xpose.msra.mxu0 %v110
    %141 = vmatpush.xpose.msra.mxu0 %v107
    %142 = vmatpush.xpose.msra.mxu0 %v104
    %143 = vmatpush.xpose.msra.mxu0 %v101
    %144 = vmatpush.xpose.msra.mxu0 %v98
    %145 = vmatpush.xpose.msra.mxu0 %v95
    %146 = vmatpush.xpose.msra.mxu0 %v92
    %147 = vmatpush.xpose.msra.mxu0 %v89
    %148 = vmatpush.xpose.msra.mxu0 %v86
    %149 = vmatmul.f32.gmra.mxu0 %v74
    %v150 = vpop.f32.mrf.mxu0
    %v151 = vadd.f32 %v55, %v150
    %152 = vmatmul.f32.gmra.mxu0 %v77
    %v153 = vpop.f32.mrf.mxu0
    %v154 = vadd.f32 %v60, %v153
    %155 = vmatmul.f32.gmra.mxu0 %v80
    %v156 = vpop.f32.mrf.mxu0
    %v157 = vadd.f32 %v65, %v156
    %158 = vmatmul.f32.gmra.mxu0 %v83
    %v159 = vpop.f32.mrf.mxu0
    %v160 = vadd.f32 %v70, %v159
    %161 = vdwg.mxu0
    %v162 = vmul.f32 %v151, 0.2
    %v163 = vmul.f32 %v154, 0.2
    %v164 = vmul.f32 %v157, 0.2
    %v165 = vmul.f32 %v160, 0.2
    %v166 = vmax.f32 %v151, %v162
    %v167 = vmax.f32 %v154, %v163
    %v168 = vmax.f32 %v157, %v164
    %v169 = vmax.f32 %v160, %v165
    %v170 = vld [vmem:[%s3] sm:$0xff]
    %v171 = vld [vmem:[%s3 + $0x8] sm:$0xff]
    %v172 = vld [vmem:[%s4] sm:$0xff]
    %v173 = vld [vmem:[%s4 + $0x8] sm:$0xff]
    %175 = vset.pattern.permute.xlu0 0
    %176 = vperm.xlu0 %175, %v172
    %v177 = vpop.permute.xlu0 %176
    %180 = vset.pattern.permute.xlu0 0
    %181 = vperm.xlu0 %180, %v173
    %v182 = vpop.permute.xlu0 %181
    %vm184 = vcmask 261120
    %v186 = vsel %vm184, %v170, 0
    %v189 = vsel %vm184, %v171, 0
    %191 = vmatpush.msra.mxu0 0.0
    %192 = vmatpush.msra.mxu0 0.0
    %193 = vmatpush.msra.mxu0 0.0
    %194 = vmatpush.msra.mxu0 0.0
    %195 = vmatpush.msra.mxu0 0.0
    %196 = vmatpush.msra.mxu0 0.0
    %197 = vmatpush.msra.mxu0 0.0
    %198 = vmatpush.msra.mxu0 0.0
    %199 = vmatpush.msra.mxu0 0.0
    %200 = vmatpush.msra.mxu0 0.0
    %201 = vmatpush.msra.mxu0 0.0
    %202 = vmatpush.msra.mxu0 0.0
    %203 = vmatpush.msra.mxu0 %v169
    %204 = vmatpush.msra.mxu0 %v168
    %205 = vmatpush.msra.mxu0 %v167
    %206 = vmatpush.msra.mxu0 %v166
    %207 = vmatmul.f32.gmra.mxu0 %v186
    %v208 = vpop.f32.mrf.mxu0
    %v209 = vadd.f32 %v177, %v208
    %210 = vmatmul.f32.gmra.mxu0 %v189
    %v211 = vpop.f32.mrf.mxu0
    %v212 = vadd.f32 %v182, %v211
    %213 = vdwg.mxu0
    %v214 = vmul.f32 %v209, 0.2
    %v215 = vmul.f32 %v212, 0.2
    %v216 = vmax.f32 %v209, %v214
    %v217 = vmax.f32 %v212, %v215
    %v218 = vld [vmem:[%s5] sm:$0xff]
    %v219 = vld [vmem:[%s5 + $0x8] sm:$0xff]
    %221 = vset.pattern.permute.xlu0 0
    %222 = vperm.xlu0 %221, %v218
    %v223 = vpop.permute.xlu0 %222
    %226 = vset.pattern.permute.xlu0 0
    %227 = vperm.xlu0 %226, %v219
    %v228 = vpop.permute.xlu0 %227
    %v230 = vmul.f32 %v216, %v223
    %v231 = vmul.f32 %v217, %v228
    %v232 = vadd.f32 %v230, %v231
    %v233 = vrot.slane %v232, 4
    %v234 = vadd.f32 %v232, %v233
    %v235 = vrot.slane %v234, 2
    %v236 = vadd.f32 %v234, %v235
    %v237 = vrot.slane %v236, 1
    %v238 = vadd.f32 %v236, %v237
    %s239 = sld [smem:[#allocation2]]
    %v240 = vstv %s239
    %v241 = vadd.f32 %v238, %v240
    %v242 = vxor.u32 %v241, 2147483648
    %v243 = vmul.f32 %v242, 1.442695
    %v244 = vpow.pop %v243
    %v245 = vadd.f32 %v244, 1.0
    %v246 = vrcp.pop %v245
    %v247 = vmul.f32 %v245, %v246
    %v248 = vsub.f32 1.0, %v247
    %v249 = vmul.f32 %v246, %v248
    %v250 = vadd.f32 %v246, %v249
    %vm251 = vweird.f32 %v245
    %vm252 = vweird.f32 %v246
    %vm253 = vmor %vm251, %vm252
    %v254 = vsel %vm253, %v246, %v250
    %v255 = vand.u32 2147483647, %v245
    %vm256 = vcmp.eq.f32.partialorder %v255, 8.507059e+37
    %v257 = vand.u32 %v245, 2147483648
    %v258 = vor.u32 1.1754944e-38, %v257
    %v259 = vsel %vm256, %v258, %v254
    %v260 = vmul.f32 1.0, %v259
    %261 = vst [vmem:[#allocation3] sm:$0x1] %v260
    // Predicated region
    $region30: #{tpu_custom_call.1} parent=1 // pred_check
      _
    $region31: #{tpu_custom_call.1} parent=1 // pred_check_branch
      %263 = sbr.rel (0) target = $region33
    $region32: #{tpu_custom_call.1} parent=1 // pred_region
      %265 = vsyncadd [#allocation4], 0
      %s267 = sshll.u32 [#allocation3], 4
      %s268 = int_to_ptr.vmem [resolvable:$true] %s267
      %s269 = sshll.u32 %s7, 4
      %s270 = int_to_ptr.hbm [resolvable:$true] %s269
      %272 = dma.vmem_to_hbm [thread:$0]  %s268, 16, %s270, [#allocation4]
    $region33: #{tpu_custom_call.1} parent=1 // pred_fallthru
      _
    // Predicated region
    $region34: #{tpu_custom_call.1} parent=1 // pred_check
      _
    $region35: #{tpu_custom_call.1} parent=1 // pred_check_branch
      %274 = sbr.rel (0) target = $region37
    $region36: #{tpu_custom_call.1} parent=1 // pred_region
      %276 = dma.done [#allocation4], 16
    $region37: #{tpu_custom_call.1} parent=1 // pred_fallthru
      _
    %277 = vsyncpa [#allocation4], 1

</llo_original>
